<compile_context>
chip_gen: v7x
topology: tpu7x:2x2x1
jax: 0.10.0
libtpu: 0.0.40
codegen_flags: <defaults>
</compile_context>

<pallas_src>
import functools

import jax
import jax.numpy as jnp
from jax import lax
from jax.experimental import pallas as pl
from jax.experimental.pallas import tpu as pltpu

STEP = 2  # self.step in the PyTorch module


def _round_down(x, m):
    return (x // m) * m


def _round_up(x, m):
    return -(-x // m) * m


@functools.lru_cache(maxsize=None)
def _default_budgets():
    """(tile_budget_bytes, vmem_limit_bytes) gated on the TPU generation."""
    try:
        vmem_cap = int(pltpu.get_tpu_info().vmem_capacity_bytes)
    except Exception:  # query unavailable -> conservative settings
        vmem_cap = 0
    if vmem_cap >= 100 * 1024 * 1024:           # v5e / v6e: 128 MiB VMEM
        return 2 * 1024 * 1024, 48 * 1024 * 1024
    return 1 * 1024 * 1024, 32 * 1024 * 1024    # v7x (64 MiB per TC) / unknown


@functools.lru_cache(maxsize=None)
def _roll_is_jnp_convention():
    """True iff pltpu.roll(x, s, a)[i] == x[(i - s) % n] (jnp.roll semantics).

    Cheap one-off hardware probe; on any failure we assume the documented
    jnp.roll-compatible convention.
    """
    def probe(o_ref):
        lane = lax.broadcasted_iota(jnp.int32, (8, 128), 1)
        o_ref[...] = pltpu.roll(lane, shift=1, axis=1)

    try:
        out = pl.pallas_call(
            probe, out_shape=jax.ShapeDtypeStruct((8, 128), jnp.int32))()
        return int(out[0, 0]) == 127
    except Exception:
        return True


def _l1_grad_partials_kernel(pred_ref, target_ref, mask_ref, out_ref,
                             carry_d_ref, carry_m_ref, *,
                             step, total_imgs, total_rows,
                             n_row_blocks, mask_imgs, mask_rows, roll_fwd):
    """One grid step: a (tb, th, W) slab (tb independent images x th rows).

    Accumulates (gradient partial, mask partial) for its image-block into a
    lane-dense (1, 1, 128) f32 output tile (lane 0 / lane 1).
    """
    i = pl.program_id(0)   # image-block index (parallel)
    j = pl.program_id(1)   # row-block index   (sequential / "arbitrary")

    tb, th, w = pred_ref.shape
    r = tb * th

    p = pred_ref[...].astype(jnp.float32)
    t = target_ref[...].astype(jnp.float32)
    m = mask_ref[...].astype(jnp.float32)
    d = (p - t) * m

    # Zero out padded images / rows of the cdiv tail blocks.  jnp.where
    # (select), not multiply, so undefined OOB data (possibly NaN/Inf) cannot
    # propagate into the sums.
    if mask_imgs:
        ok = (i * tb + lax.broadcasted_iota(jnp.int32, (tb, th, w), 0)) < total_imgs
        d = jnp.where(ok, d, 0.0)
        m = jnp.where(ok, m, 0.0)
    if mask_rows:
        ok = (j * th + lax.broadcasted_iota(jnp.int32, (tb, th, w), 1)) < total_rows
        d = jnp.where(ok, d, 0.0)
        m = jnp.where(ok, m, 0.0)

    # Collapse (image, row) -> rows: all shifted operands stay (8,128)-aligned
    # and the step-shifts become XLU rolls instead of unaligned VMEM copies.
    d2 = d.reshape(r, w)
    m2 = m.reshape(r, w)

    # Choose shifts so that rolled[q] == original[q + step] regardless of the
    # hardware roll convention (shift is always non-negative).
    row_shift = (r - step) if roll_fwd else step
    lane_shift = (w - step) if roll_fwd else step

    d_dn = pltpu.roll(d2, shift=row_shift, axis=0)
    m_dn = pltpu.roll(m2, shift=row_shift, axis=0)
    d_rt = pltpu.roll(d2, shift=lane_shift, axis=1)
    m_rt = pltpu.roll(m2, shift=lane_shift, axis=1)

    # Pair-validity masks: a vertical pair (h, h+step) lives inside this block
    # iff the local row (within its image) is < th - step.  This also kills
    # cross-image pairs when several images are fused into one block, and the
    # wrap-around rows of the roll.
    row_loc = lax.broadcasted_iota(jnp.int32, (tb, th, w), 1).reshape(r, w)
    v_ok = row_loc < (th - step)
    lane = lax.broadcasted_iota(jnp.int32, (r, w), 1)
    h_ok = lane < (w - step)

    v_sum = jnp.sum(jnp.where(v_ok, jnp.abs(d2 - d_dn) * (m2 * m_dn), 0.0))
    h_sum = jnp.sum(jnp.where(h_ok, jnp.abs(d2 - d_rt) * (m2 * m_rt), 0.0))
    m_sum = jnp.sum(m2)
    grad_sum = v_sum + h_sum

    if n_row_blocks > 1:
        # Vertical pairs straddling the boundary between row-block j-1 and j:
        # the last `step` rows of the previous block were stashed in the carry
        # scratch (only used when tb == 1, i.e. one image per block).
        cb = jnp.sum(jnp.abs(carry_d_ref[0:step, :] - d2[0:step, :])
                     * (carry_m_ref[0:step, :] * m2[0:step, :]))
        grad_sum = grad_sum + jnp.where(j > 0, cb, 0.0)
        # Stash this block's last `step` rows for the next row block.
        carry_d_ref[0:step, :] = d2[r - step:r, :]
        carry_m_ref[0:step, :] = m2[r - step:r, :]

    # Lane-dense partial: lane 0 -> gradient sum, lane 1 -> mask sum.
    lane_o = lax.broadcasted_iota(jnp.int32, (1, 1, 128), 2)
    part = jnp.where(lane_o == 0, grad_sum,
                     jnp.where(lane_o == 1, m_sum, 0.0)).astype(jnp.float32)

    if n_row_blocks > 1:
        @pl.when(j == 0)
        def _():
            out_ref[...] = jnp.zeros_like(out_ref)
        out_ref[...] += part
    else:
        out_ref[...] = part


def l1_image_gradient_loss(pred, target, mask, step=STEP, *,
                           tile_budget_bytes=None, vmem_limit_bytes=None):
    """pred/target/mask: (B, C, H, W); returns the scalar f32 loss.

    Inputs may be f32 or bf16; all in-kernel arithmetic is f32.
    """
    B, C, H, W = pred.shape
    assert target.shape == pred.shape and mask.shape == pred.shape
    assert 0 < step < H and step < W, "step must be smaller than spatial dims"

    BC = B * C
    pred_f = pred.reshape(BC, H, W)
    target_f = target.reshape(BC, H, W)
    mask_f = mask.reshape(BC, H, W)

    def_budget, def_limit = _default_budgets()
    budget_bytes = def_budget if tile_budget_bytes is None else tile_budget_bytes
    limit_bytes = def_limit if vmem_limit_bytes is None else vmem_limit_bytes

    # Budget is counted in f32 elements (intermediates are f32 even for bf16
    # inputs), with a floor of one (8, W) row group.
    budget_elems = max(8 * W, budget_bytes // 4)

    if H * W <= budget_elems:
        # Small images: fuse many whole images into one block.
        th = H
        tb = max(1, min(BC, budget_elems // (H * W)))
    else:
        # Large images: one image per block, tiled over rows (multiple of 8).
        tb = 1
        th = min(H, max(8, _round_down(budget_elems // W, 8)))

    n_i = pl.cdiv(BC, tb)   # image blocks (parallel)
    n_j = pl.cdiv(H, th)    # row blocks   (sequential, carry across them)
    assert step <= th, "step must not exceed the row-tile size"

    mask_imgs = (BC % tb) != 0
    mask_rows = (H % th) != 0
    carry_rows = _round_up(max(step, 1), 8)

    kernel = functools.partial(
        _l1_grad_partials_kernel,
        step=step, total_imgs=BC, total_rows=H, n_row_blocks=n_j,
        mask_imgs=mask_imgs, mask_rows=mask_rows,
        roll_fwd=_roll_is_jnp_convention())

    img_spec = pl.BlockSpec((tb, th, W), lambda i, j: (i, j, 0))

    partials = pl.pallas_call(
        kernel,
        out_shape=jax.ShapeDtypeStruct((n_i, 1, 128), jnp.float32),
        grid=(n_i, n_j),
        in_specs=[img_spec, img_spec, img_spec],
        out_specs=pl.BlockSpec((1, 1, 128), lambda i, j: (i, 0, 0)),
        scratch_shapes=[pltpu.VMEM((carry_rows, W), jnp.float32),
                        pltpu.VMEM((carry_rows, W), jnp.float32)],
        compiler_params=pltpu.CompilerParams(
            dimension_semantics=("parallel", "arbitrary"),
            vmem_limit_bytes=limit_bytes,
        ),
    )(pred_f, target_f, mask_f)

    grad_sum = jnp.sum(partials[:, 0, 0])
    mask_sum = jnp.sum(partials[:, 0, 1])
    gradient_loss = grad_sum / 2.0
    return gradient_loss / (mask_sum + 1e-6)


def l1_image_gradient_loss_ref(pred, target, mask, step=STEP):
    """Pure-JAX reference mirroring the PyTorch forward exactly."""
    N = jnp.sum(mask)
    diff = (pred - target) * mask
    v_g = jnp.abs(diff[:, :, :-step, :] - diff[:, :, step:, :])
    v_m = mask[:, :, :-step, :] * mask[:, :, step:, :]
    v_g = v_g * v_m
    h_g = jnp.abs(diff[:, :, :, :-step] - diff[:, :, :, step:])
    h_m = mask[:, :, :, :-step] * mask[:, :, :, step:]
    h_g = h_g * h_m
    loss = (jnp.sum(h_g) + jnp.sum(v_g)) / 2.0
    return loss / (N + 1e-6)


if __name__ == "__main__":
    def make_inputs(shape, key):
        k1, k2, k3 = jax.random.split(key, 3)
        p = jax.random.normal(k1, shape, dtype=jnp.float32)
        t = jax.random.normal(k2, shape, dtype=jnp.float32)
        m = (jax.random.uniform(k3, shape) > 0.3).astype(jnp.float32)
        return p, t, m

    # 1) Main demo shape: whole images fused into one block.
    p, t, m = make_inputs((2, 4, 16, 16), jax.random.PRNGKey(0))
    out = jax.block_until_ready(l1_image_gradient_loss(p, t, m))
    ref = jax.block_until_ready(l1_image_gradient_loss_ref(p, t, m))
    assert jnp.allclose(out, ref, rtol=1e-5, atol=1e-6), (out, ref)

    # 2) Force the row-tiling / carry path + ragged tail row-block.
    p, t, m = make_inputs((1, 3, 40, 128), jax.random.PRNGKey(1))
    out = jax.block_until_ready(
        l1_image_gradient_loss(p, t, m, tile_budget_bytes=16 * 128 * 4))
    ref = jax.block_until_ready(l1_image_gradient_loss_ref(p, t, m))
    assert jnp.allclose(out, ref, rtol=1e-5, atol=1e-6), (out, ref)

    # 3) Force a ragged tail image-block (B*C not divisible by tb).
    p, t, m = make_inputs((1, 5, 8, 128), jax.random.PRNGKey(2))
    out = jax.block_until_ready(
        l1_image_gradient_loss(p, t, m, tile_budget_bytes=3 * 8 * 128 * 4))
    ref = jax.block_until_ready(l1_image_gradient_loss_ref(p, t, m))
    assert jnp.allclose(out, ref, rtol=1e-5, atol=1e-6), (out, ref)

    print("KERNEL_OK")
</pallas_src>

<mosaic_0001>
module attributes {stable_mosaic.version = 11 : i64} {
  func.func @_l1_grad_partials_kernel(%arg0: i32, %arg1: i32, %arg2: memref<8x16x16xf32, #tpu.memory_space<vmem>>, %arg3: memref<8x16x16xf32, #tpu.memory_space<vmem>>, %arg4: memref<8x16x16xf32, #tpu.memory_space<vmem>>, %arg5: memref<1x1x128xf32, #tpu.memory_space<vmem>>, %arg6: memref<8x16xf32, #tpu.memory_space<vmem>>, %arg7: memref<8x16xf32, #tpu.memory_space<vmem>>) attributes {dimension_semantics = [#tpu.dimension_semantics<parallel>, #tpu.dimension_semantics<arbitrary>], iteration_bounds = array<i64: 1, 1>, scalar_prefetch = 0 : i64, scratch_operands = 2 : i64, tpu.core_type = #tpu.core_type<tc>, window_params = [{transform_indices = @transform_0, window_bounds = array<i64: 8, 16, 16>}, {transform_indices = @transform_1, window_bounds = array<i64: 8, 16, 16>}, {transform_indices = @transform_2, window_bounds = array<i64: 8, 16, 16>}, {transform_indices = @transform_3, window_bounds = array<i64: 1, 1, 128>}]} {
    %c0 = arith.constant 0 : index
    %c0_0 = arith.constant 0 : index
    %c0_1 = arith.constant 0 : index
    %0 = vector.load %arg2[%c0, %c0_0, %c0_1] : memref<8x16x16xf32, #tpu.memory_space<vmem>>, vector<8x16x16xf32>
    %c0_2 = arith.constant 0 : index
    %c0_3 = arith.constant 0 : index
    %c0_4 = arith.constant 0 : index
    %1 = vector.load %arg3[%c0_2, %c0_3, %c0_4] : memref<8x16x16xf32, #tpu.memory_space<vmem>>, vector<8x16x16xf32>
    %c0_5 = arith.constant 0 : index
    %c0_6 = arith.constant 0 : index
    %c0_7 = arith.constant 0 : index
    %2 = vector.load %arg4[%c0_5, %c0_6, %c0_7] : memref<8x16x16xf32, #tpu.memory_space<vmem>>, vector<8x16x16xf32>
    %3 = arith.subf %0, %1 : vector<8x16x16xf32>
    %4 = arith.mulf %3, %2 : vector<8x16x16xf32>
    %5 = vector.shape_cast %4 : vector<8x16x16xf32> to vector<128x16xf32>
    %6 = vector.shape_cast %2 : vector<8x16x16xf32> to vector<128x16xf32>
    %c126_i32 = arith.constant 126 : i32
    %7 = tpu.dynamic_rotate %5 by %c126_i32 dim 0 : vector<128x16xf32>, i32 -> vector<128x16xf32>
    %c126_i32_8 = arith.constant 126 : i32
    %8 = tpu.dynamic_rotate %6 by %c126_i32_8 dim 0 : vector<128x16xf32>, i32 -> vector<128x16xf32>
    %c14_i32 = arith.constant 14 : i32
    %9 = tpu.dynamic_rotate %5 by %c14_i32 dim 1 : vector<128x16xf32>, i32 -> vector<128x16xf32>
    %c14_i32_9 = arith.constant 14 : i32
    %10 = tpu.dynamic_rotate %6 by %c14_i32_9 dim 1 : vector<128x16xf32>, i32 -> vector<128x16xf32>
    %11 = tpu.iota {dimensions = array<i32: 1>} : vector<8x16x16xi32>
    %12 = vector.shape_cast %11 : vector<8x16x16xi32> to vector<128x16xi32>
    %c14_i32_10 = arith.constant 14 : i32
    %13 = vector.broadcast %c14_i32_10 : i32 to vector<128x16xi32>
    %14 = arith.cmpi slt, %12, %13 : vector<128x16xi32>
    %15 = tpu.iota {dimensions = array<i32: 1>} : vector<128x16xi32>
    %c14_i32_11 = arith.constant 14 : i32
    %16 = vector.broadcast %c14_i32_11 : i32 to vector<128x16xi32>
    %17 = arith.cmpi slt, %15, %16 : vector<128x16xi32>
    %18 = arith.subf %5, %7 : vector<128x16xf32>
    %19 = math.absf %18 : vector<128x16xf32>
    %20 = arith.mulf %6, %8 : vector<128x16xf32>
    %21 = arith.mulf %19, %20 : vector<128x16xf32>
    %cst = arith.constant 0.000000e+00 : f32
    %22 = vector.broadcast %cst : f32 to vector<128x16xf32>
    %23 = arith.select %14, %21, %22 : vector<128x16xi1>, vector<128x16xf32>
    %24 = vector.shape_cast %23 : vector<128x16xf32> to vector<1x128x16xf32>
    %cst_12 = arith.constant dense<0.000000e+00> : vector<1xf32>
    %25 = vector.multi_reduction <add>, %24, %cst_12 [1, 2] : vector<1x128x16xf32> to vector<1xf32>
    %26 = vector.shape_cast %25 : vector<1xf32> to vector<1x1x1xf32>
    %27 = vector.extract %26[0, 0, 0] : f32 from vector<1x1x1xf32>
    %28 = arith.subf %5, %9 : vector<128x16xf32>
    %29 = math.absf %28 : vector<128x16xf32>
    %30 = arith.mulf %6, %10 : vector<128x16xf32>
    %31 = arith.mulf %29, %30 : vector<128x16xf32>
    %cst_13 = arith.constant 0.000000e+00 : f32
    %32 = vector.broadcast %cst_13 : f32 to vector<128x16xf32>
    %33 = arith.select %17, %31, %32 : vector<128x16xi1>, vector<128x16xf32>
    %34 = vector.shape_cast %33 : vector<128x16xf32> to vector<1x128x16xf32>
    %cst_14 = arith.constant dense<0.000000e+00> : vector<1xf32>
    %35 = vector.multi_reduction <add>, %34, %cst_14 [1, 2] : vector<1x128x16xf32> to vector<1xf32>
    %36 = vector.shape_cast %35 : vector<1xf32> to vector<1x1x1xf32>
    %37 = vector.extract %36[0, 0, 0] : f32 from vector<1x1x1xf32>
    %38 = vector.shape_cast %6 : vector<128x16xf32> to vector<1x128x16xf32>
    %cst_15 = arith.constant dense<0.000000e+00> : vector<1xf32>
    %39 = vector.multi_reduction <add>, %38, %cst_15 [1, 2] : vector<1x128x16xf32> to vector<1xf32>
    %40 = vector.shape_cast %39 : vector<1xf32> to vector<1x1x1xf32>
    %41 = vector.extract %40[0, 0, 0] : f32 from vector<1x1x1xf32>
    %42 = arith.addf %27, %37 : f32
    %43 = tpu.iota {dimensions = array<i32: 2>} : vector<1x1x128xi32>
    %c0_i32 = arith.constant 0 : i32
    %44 = vector.broadcast %c0_i32 : i32 to vector<1x1x128xi32>
    %45 = arith.cmpi eq, %43, %44 : vector<1x1x128xi32>
    %c1_i32 = arith.constant 1 : i32
    %46 = vector.broadcast %c1_i32 : i32 to vector<1x1x128xi32>
    %47 = arith.cmpi eq, %43, %46 : vector<1x1x128xi32>
    %cst_16 = arith.constant 0.000000e+00 : f32
    %48 = vector.broadcast %41 : f32 to vector<1x1x128xf32>
    %49 = vector.broadcast %cst_16 : f32 to vector<1x1x128xf32>
    %50 = arith.select %47, %48, %49 : vector<1x1x128xi1>, vector<1x1x128xf32>
    %51 = vector.broadcast %42 : f32 to vector<1x1x128xf32>
    %52 = arith.select %45, %51, %50 : vector<1x1x128xi1>, vector<1x1x128xf32>
    %c0_17 = arith.constant 0 : index
    %c0_18 = arith.constant 0 : index
    %c0_19 = arith.constant 0 : index
    %53 = vector.load %arg5[%c0_17, %c0_18, %c0_19] : memref<1x1x128xf32, #tpu.memory_space<vmem>>, vector<1x1x128xf32>
    tpu.vector_store %arg5[%c0_17, %c0_18, %c0_19], %52 {strides = array<i32>} : memref<1x1x128xf32, #tpu.memory_space<vmem>>, vector<1x1x128xf32>,
    return
  }
  func.func @transform_0(%arg0: i32, %arg1: i32) -> (i32, i32, i32) {
    %c0_i32 = arith.constant 0 : i32
    %c0_i32_0 = arith.constant 0 : i32
    return %arg0, %arg1, %c0_i32 : i32, i32, i32
  }
  func.func @transform_1(%arg0: i32, %arg1: i32) -> (i32, i32, i32) {
    %c0_i32 = arith.constant 0 : i32
    %c0_i32_0 = arith.constant 0 : i32
    return %arg0, %arg1, %c0_i32 : i32, i32, i32
  }
  func.func @transform_2(%arg0: i32, %arg1: i32) -> (i32, i32, i32) {
    %c0_i32 = arith.constant 0 : i32
    %c0_i32_0 = arith.constant 0 : i32
    return %arg0, %arg1, %c0_i32 : i32, i32, i32
  }
  func.func @transform_3(%arg0: i32, %arg1: i32) -> (i32, i32, i32) {
    %c0_i32 = arith.constant 0 : i32
    %c0_i32_0 = arith.constant 0 : i32
    %c0_i32_1 = arith.constant 0 : i32
    return %arg0, %c0_i32, %c0_i32_0 : i32, i32, i32
  }
}

</mosaic_0001>

<llo_original>
// kernel: tpu_custom_call.1
$region0: #{tpu_custom_call.1}
  #allocation0 [shape = 'u32[]', space=smem, size = 0x4, offset = 0x4, fixed_abs, tag = 'smem constant byte address 0x4 - core index']
  #allocation1 [shape = 'u32[144,128]{1,0:T(1,128)}', space=vmem, size = 0x12000, scoped, tag = 'internal scratch']
  #allocation2 [shape = 'f32[8,16]{1,0:T(8,128)}', space=vmem, size = 0x1000, scoped, tag = 'scratch operand']
  #allocation3 [shape = 'f32[8,16]{1,0:T(8,128)}', space=vmem, size = 0x1000, scoped, tag = 'scratch operand']
  %s0 = inlined_call_operand.hbm [shape: f32[8,16,16], index: 0, kind: input, shape index: {}]
  %s1 = inlined_call_operand.hbm [shape: f32[8,16,16], index: 1, kind: input, shape index: {}]
  %s2 = inlined_call_operand.hbm [shape: f32[8,16,16], index: 2, kind: input, shape index: {}]
  %s3 = inlined_call_operand.hbm [shape: f32[1,1,128], index: 3, kind: output, shape index: {}]
  %s4 = sld [smem:[#allocation0]]
  $region34: #{tpu_custom_call.1} parent=0
    _
  %s6 = ssub.s32 1, %s4
  %s7 = scalar_select 0, %s6, %s4
  $region1: #{tpu_custom_call.1} parent=0
    #allocation4 [shape = 'u8[65536]{0}', space=vmem, size = 0x10000, scoped, tag = 'input window, operand 0, single buffered']
    #allocation5 [shape = 's32[1]{0}', space=sflag, size = 0x4, scoped, tag = 'scoped memory for tpu_custom_call.1']
    #allocation6 [shape = 's32[1]{0}', space=sflag, size = 0x4, scoped, tag = 'scoped memory for tpu_custom_call.1']
    #allocation7 [shape = 'u8[65536]{0}', space=vmem, size = 0x10000, scoped, tag = 'input window, operand 1, single buffered']
    #allocation8 [shape = 's32[1]{0}', space=sflag, size = 0x4, scoped, tag = 'scoped memory for tpu_custom_call.1']
    #allocation9 [shape = 'u8[65536]{0}', space=vmem, size = 0x10000, scoped, tag = 'input window, operand 2, single buffered']
    #allocation10 [shape = 'u8[512]{0}', space=vmem, size = 0x400, scoped, tag = 'output window, operand 0, single buffered']
    %8 = vsyncpa [#allocation5], 0
    %9 = vsyncpa [#allocation8], 0
    %10 = vsyncpa [#allocation6], 0
    // Predicated region
    $region2: #{tpu_custom_call.1} parent=1 // pred_check
      _
    $region3: #{tpu_custom_call.1} parent=1 // pred_check_branch
      %12 = sbr.rel (0) target = $region5
    $region4: #{tpu_custom_call.1} parent=1 // pred_region
      %s14 = ssub.s32 2048, 2048
      %15 = vsyncadd [#allocation5], %s14
      %s16 = sshll.u32 [#allocation4], 4
      %s17 = int_to_ptr.vmem [resolvable:$true] %s16
      %22 = dma.hbm_to_vmem [thread:$0]  %s0, 2048, %s17, [#allocation5], 128, 128, 8
    $region5: #{tpu_custom_call.1} parent=1 // pred_fallthru
      _
    // Predicated region
    $region6: #{tpu_custom_call.1} parent=1 // pred_check
      _
    $region7: #{tpu_custom_call.1} parent=1 // pred_check_branch
      %24 = sbr.rel (0) target = $region9
    $region8: #{tpu_custom_call.1} parent=1 // pred_region
      %s26 = ssub.s32 2048, 2048
      %27 = vsyncadd [#allocation8], %s26
      %s28 = sshll.u32 [#allocation7], 4
      %s29 = int_to_ptr.vmem [resolvable:$true] %s28
      %34 = dma.hbm_to_vmem [thread:$0]  %s1, 2048, %s29, [#allocation8], 128, 128, 8
    $region9: #{tpu_custom_call.1} parent=1 // pred_fallthru
      _
    // Predicated region
    $region10: #{tpu_custom_call.1} parent=1 // pred_check
      _
    $region11: #{tpu_custom_call.1} parent=1 // pred_check_branch
      %36 = sbr.rel (0) target = $region13
    $region12: #{tpu_custom_call.1} parent=1 // pred_region
      %s38 = ssub.s32 2048, 2048
      %39 = vsyncadd [#allocation8], %s38
      %s40 = sshll.u32 [#allocation9], 4
      %s41 = int_to_ptr.vmem [resolvable:$true] %s40
      %46 = dma.hbm_to_vmem [thread:$0]  %s2, 2048, %s41, [#allocation8], 128, 128, 8
    $region13: #{tpu_custom_call.1} parent=1 // pred_fallthru
      _
    // Predicated region
    $region14: #{tpu_custom_call.1} parent=1 // pred_check
      _
    $region15: #{tpu_custom_call.1} parent=1 // pred_check_branch
      %48 = sbr.rel (0) target = $region17
    $region16: #{tpu_custom_call.1} parent=1 // pred_region
      %49 = dma.done [#allocation5], 2048
    $region17: #{tpu_custom_call.1} parent=1 // pred_fallthru
      _
    // Predicated region
    $region18: #{tpu_custom_call.1} parent=1 // pred_check
      _
    $region19: #{tpu_custom_call.1} parent=1 // pred_check_branch
      %51 = sbr.rel (0) target = $region21
    $region20: #{tpu_custom_call.1} parent=1 // pred_region
      %52 = dma.done [#allocation8], 2048
    $region21: #{tpu_custom_call.1} parent=1 // pred_fallthru
      _
    // Predicated region
    $region22: #{tpu_custom_call.1} parent=1 // pred_check
      _
    $region23: #{tpu_custom_call.1} parent=1 // pred_check_branch
      %54 = sbr.rel (0) target = $region25
    $region24: #{tpu_custom_call.1} parent=1 // pred_region
      %55 = dma.done [#allocation8], 2048
    $region25: #{tpu_custom_call.1} parent=1 // pred_fallthru
      _
    %v56 = vld [vmem:[#allocation4] sm:$0xff]
    %v57 = vld [vmem:[#allocation4 + $0x8] sm:$0xff]
    %v58 = vld [vmem:[#allocation4 + $0x10] sm:$0xff]
    %v59 = vld [vmem:[#allocation4 + $0x18] sm:$0xff]
    %v60 = vld [vmem:[#allocation4 + $0x20] sm:$0xff]
    %v61 = vld [vmem:[#allocation4 + $0x28] sm:$0xff]
    %v62 = vld [vmem:[#allocation4 + $0x30] sm:$0xff]
    %v63 = vld [vmem:[#allocation4 + $0x38] sm:$0xff]
    %v64 = vld [vmem:[#allocation4 + $0x40] sm:$0xff]
    %v65 = vld [vmem:[#allocation4 + $0x48] sm:$0xff]
    %v66 = vld [vmem:[#allocation4 + $0x50] sm:$0xff]
    %v67 = vld [vmem:[#allocation4 + $0x58] sm:$0xff]
    %v68 = vld [vmem:[#allocation4 + $0x60] sm:$0xff]
    %v69 = vld [vmem:[#allocation4 + $0x68] sm:$0xff]
    %v70 = vld [vmem:[#allocation4 + $0x70] sm:$0xff]
    %v71 = vld [vmem:[#allocation4 + $0x78] sm:$0xff]
    %v72 = vld [vmem:[#allocation7] sm:$0xff]
    %v73 = vld [vmem:[#allocation7 + $0x8] sm:$0xff]
    %v74 = vld [vmem:[#allocation7 + $0x10] sm:$0xff]
    %v75 = vld [vmem:[#allocation7 + $0x18] sm:$0xff]
    %v76 = vld [vmem:[#allocation7 + $0x20] sm:$0xff]
    %v77 = vld [vmem:[#allocation7 + $0x28] sm:$0xff]
    %v78 = vld [vmem:[#allocation7 + $0x30] sm:$0xff]
    %v79 = vld [vmem:[#allocation7 + $0x38] sm:$0xff]
    %v80 = vld [vmem:[#allocation7 + $0x40] sm:$0xff]
    %v81 = vld [vmem:[#allocation7 + $0x48] sm:$0xff]
    %v82 = vld [vmem:[#allocation7 + $0x50] sm:$0xff]
    %v83 = vld [vmem:[#allocation7 + $0x58] sm:$0xff]
    %v84 = vld [vmem:[#allocation7 + $0x60] sm:$0xff]
    %v85 = vld [vmem:[#allocation7 + $0x68] sm:$0xff]
    %v86 = vld [vmem:[#allocation7 + $0x70] sm:$0xff]
    %v87 = vld [vmem:[#allocation7 + $0x78] sm:$0xff]
    %v88 = vld [vmem:[#allocation9] sm:$0xff]
    %v89 = vld [vmem:[#allocation9 + $0x8] sm:$0xff]
    %v90 = vld [vmem:[#allocation9 + $0x10] sm:$0xff]
    %v91 = vld [vmem:[#allocation9 + $0x18] sm:$0xff]
    %v92 = vld [vmem:[#allocation9 + $0x20] sm:$0xff]
    %v93 = vld [vmem:[#allocation9 + $0x28] sm:$0xff]
    %v94 = vld [vmem:[#allocation9 + $0x30] sm:$0xff]
    %v95 = vld [vmem:[#allocation9 + $0x38] sm:$0xff]
    %v96 = vld [vmem:[#allocation9 + $0x40] sm:$0xff]
    %v97 = vld [vmem:[#allocation9 + $0x48] sm:$0xff]
    %v98 = vld [vmem:[#allocation9 + $0x50] sm:$0xff]
    %v99 = vld [vmem:[#allocation9 + $0x58] sm:$0xff]
    %v100 = vld [vmem:[#allocation9 + $0x60] sm:$0xff]
    %v101 = vld [vmem:[#allocation9 + $0x68] sm:$0xff]
    %v102 = vld [vmem:[#allocation9 + $0x70] sm:$0xff]
    %v103 = vld [vmem:[#allocation9 + $0x78] sm:$0xff]
    %v104 = vsub.f32 %v56, %v72
    %v105 = vsub.f32 %v57, %v73
    %v106 = vsub.f32 %v58, %v74
    %v107 = vsub.f32 %v59, %v75
    %v108 = vsub.f32 %v60, %v76
    %v109 = vsub.f32 %v61, %v77
    %v110 = vsub.f32 %v62, %v78
    %v111 = vsub.f32 %v63, %v79
    %v112 = vsub.f32 %v64, %v80
    %v113 = vsub.f32 %v65, %v81
    %v114 = vsub.f32 %v66, %v82
    %v115 = vsub.f32 %v67, %v83
    %v116 = vsub.f32 %v68, %v84
    %v117 = vsub.f32 %v69, %v85
    %v118 = vsub.f32 %v70, %v86
    %v119 = vsub.f32 %v71, %v87
    %v120 = vmul.f32 %v104, %v88
    %v121 = vmul.f32 %v105, %v89
    %v122 = vmul.f32 %v106, %v90
    %v123 = vmul.f32 %v107, %v91
    %v124 = vmul.f32 %v108, %v92
    %v125 = vmul.f32 %v109, %v93
    %v126 = vmul.f32 %v110, %v94
    %v127 = vmul.f32 %v111, %v95
    %v128 = vmul.f32 %v112, %v96
    %v129 = vmul.f32 %v113, %v97
    %v130 = vmul.f32 %v114, %v98
    %v131 = vmul.f32 %v115, %v99
    %v132 = vmul.f32 %v116, %v100
    %v133 = vmul.f32 %v117, %v101
    %v134 = vmul.f32 %v118, %v102
    %v135 = vmul.f32 %v119, %v103
    %v136 = vrot.slane %v120, 2
    %v137 = vrot.slane %v121, 2
    %v138 = vrot.slane %v122, 2
    %v139 = vrot.slane %v123, 2
    %v140 = vrot.slane %v124, 2
    %v141 = vrot.slane %v125, 2
    %v142 = vrot.slane %v126, 2
    %v143 = vrot.slane %v127, 2
    %v144 = vrot.slane %v128, 2
    %v145 = vrot.slane %v129, 2
    %v146 = vrot.slane %v130, 2
    %v147 = vrot.slane %v131, 2
    %v148 = vrot.slane %v132, 2
    %v149 = vrot.slane %v133, 2
    %v150 = vrot.slane %v134, 2
    %v151 = vrot.slane %v135, 2
    %v152 = vlaneseq
    %v153 = vshrl.u32 %v152, 7
    %vm154 = vcmp.lt.s32.totalorder %v153, 6
    %v155 = vsel %vm154, %v150, %v151
    %v156 = vsel %vm154, %v149, %v150
    %v157 = vsel %vm154, %v148, %v149
    %v158 = vsel %vm154, %v147, %v148
    %v159 = vsel %vm154, %v146, %v147
    %v160 = vsel %vm154, %v145, %v146
    %v161 = vsel %vm154, %v144, %v145
    %v162 = vsel %vm154, %v143, %v144
    %v163 = vsel %vm154, %v142, %v143
    %v164 = vsel %vm154, %v141, %v142
    %v165 = vsel %vm154, %v140, %v141
    %v166 = vsel %vm154, %v139, %v140
    %v167 = vsel %vm154, %v138, %v139
    %v168 = vsel %vm154, %v137, %v138
    %v169 = vsel %vm154, %v136, %v137
    %v170 = vsel %vm154, %v151, %v136
    %v171 = vrot.slane %v88, 2
    %v172 = vrot.slane %v89, 2
    %v173 = vrot.slane %v90, 2
    %v174 = vrot.slane %v91, 2
    %v175 = vrot.slane %v92, 2
    %v176 = vrot.slane %v93, 2
    %v177 = vrot.slane %v94, 2
    %v178 = vrot.slane %v95, 2
    %v179 = vrot.slane %v96, 2
    %v180 = vrot.slane %v97, 2
    %v181 = vrot.slane %v98, 2
    %v182 = vrot.slane %v99, 2
    %v183 = vrot.slane %v100, 2
    %v184 = vrot.slane %v101, 2
    %v185 = vrot.slane %v102, 2
    %v186 = vrot.slane %v103, 2
    %v187 = vsel %vm154, %v185, %v186
    %v188 = vsel %vm154, %v184, %v185
    %v189 = vsel %vm154, %v183, %v184
    %v190 = vsel %vm154, %v182, %v183
    %v191 = vsel %vm154, %v181, %v182
    %v192 = vsel %vm154, %v180, %v181
    %v193 = vsel %vm154, %v179, %v180
    %v194 = vsel %vm154, %v178, %v179
    %v195 = vsel %vm154, %v177, %v178
    %v196 = vsel %vm154, %v176, %v177
    %v197 = vsel %vm154, %v175, %v176
    %v198 = vsel %vm154, %v174, %v175
    %v199 = vsel %vm154, %v173, %v174
    %v200 = vsel %vm154, %v172, %v173
    %v201 = vsel %vm154, %v171, %v172
    %v202 = vsel %vm154, %v186, %v171
    %vm203 = vcmask 1047680
    %204 = vrot.lane.b32.xlu0 %v120, 16
    %v205 = vpop.permute.xlu0 %204
    %v206 = vsel %vm203, %v205, %v120
    %207 = vrot.lane.b32.xlu0 %v121, 16
    %v208 = vpop.permute.xlu0 %207
    %v209 = vsel %vm203, %v208, %v121
    %210 = vrot.lane.b32.xlu0 %v122, 16
    %v211 = vpop.permute.xlu0 %210
    %v212 = vsel %vm203, %v211, %v122
    %213 = vrot.lane.b32.xlu0 %v123, 16
    %v214 = vpop.permute.xlu0 %213
    %v215 = vsel %vm203, %v214, %v123
    %216 = vrot.lane.b32.xlu0 %v124, 16
    %v217 = vpop.permute.xlu0 %216
    %v218 = vsel %vm203, %v217, %v124
    %219 = vrot.lane.b32.xlu0 %v125, 16
    %v220 = vpop.permute.xlu0 %219
    %v221 = vsel %vm203, %v220, %v125
    %222 = vrot.lane.b32.xlu0 %v126, 16
    %v223 = vpop.permute.xlu0 %222
    %v224 = vsel %vm203, %v223, %v126
    %225 = vrot.lane.b32.xlu0 %v127, 16
    %v226 = vpop.permute.xlu0 %225
    %v227 = vsel %vm203, %v226, %v127
    %228 = vrot.lane.b32.xlu0 %v128, 16
    %v229 = vpop.permute.xlu0 %228
    %v230 = vsel %vm203, %v229, %v128
    %231 = vrot.lane.b32.xlu0 %v129, 16
    %v232 = vpop.permute.xlu0 %231
    %v233 = vsel %vm203, %v232, %v129
    %234 = vrot.lane.b32.xlu0 %v130, 16
    %v235 = vpop.permute.xlu0 %234
    %v236 = vsel %vm203, %v235, %v130
    %237 = vrot.lane.b32.xlu0 %v131, 16
    %v238 = vpop.permute.xlu0 %237
    %v239 = vsel %vm203, %v238, %v131
    %240 = vrot.lane.b32.xlu0 %v132, 16
    %v241 = vpop.permute.xlu0 %240
    %v242 = vsel %vm203, %v241, %v132
    %243 = vrot.lane.b32.xlu0 %v133, 16
    %v244 = vpop.permute.xlu0 %243
    %v245 = vsel %vm203, %v244, %v133
    %246 = vrot.lane.b32.xlu0 %v134, 16
    %v247 = vpop.permute.xlu0 %246
    %v248 = vsel %vm203, %v247, %v134
    %249 = vrot.lane.b32.xlu0 %v135, 16
    %v250 = vpop.permute.xlu0 %249
    %v251 = vsel %vm203, %v250, %v135
    %252 = vrot.lane.b32.xlu0 %v206, 16
    %v253 = vpop.permute.xlu0 %252
    %254 = vrot.lane.b32.xlu0 %v209, 16
    %v255 = vpop.permute.xlu0 %254
    %256 = vrot.lane.b32.xlu0 %v212, 16
    %v257 = vpop.permute.xlu0 %256
    %258 = vrot.lane.b32.xlu0 %v215, 16
    %v259 = vpop.permute.xlu0 %258
    %260 = vrot.lane.b32.xlu0 %v218, 16
    %v261 = vpop.permute.xlu0 %260
    %262 = vrot.lane.b32.xlu0 %v221, 16
    %v263 = vpop.permute.xlu0 %262
    %264 = vrot.lane.b32.xlu0 %v224, 16
    %v265 = vpop.permute.xlu0 %264
    %266 = vrot.lane.b32.xlu0 %v227, 16
    %v267 = vpop.permute.xlu0 %266
    %268 = vrot.lane.b32.xlu0 %v230, 16
    %v269 = vpop.permute.xlu0 %268
    %270 = vrot.lane.b32.xlu0 %v233, 16
    %v271 = vpop.permute.xlu0 %270
    %272 = vrot.lane.b32.xlu0 %v236, 16
    %v273 = vpop.permute.xlu0 %272
    %274 = vrot.lane.b32.xlu0 %v239, 16
    %v275 = vpop.permute.xlu0 %274
    %276 = vrot.lane.b32.xlu0 %v242, 16
    %v277 = vpop.permute.xlu0 %276
    %278 = vrot.lane.b32.xlu0 %v245, 16
    %v279 = vpop.permute.xlu0 %278
    %280 = vrot.lane.b32.xlu0 %v248, 16
    %v281 = vpop.permute.xlu0 %280
    %282 = vrot.lane.b32.xlu0 %v251, 16
    %v283 = vpop.permute.xlu0 %282
    %v284 = vsel %vm203, %v253, %v120
    %v285 = vsel %vm203, %v255, %v121
    %v286 = vsel %vm203, %v257, %v122
    %v287 = vsel %vm203, %v259, %v123
    %v288 = vsel %vm203, %v261, %v124
    %v289 = vsel %vm203, %v263, %v125
    %v290 = vsel %vm203, %v265, %v126
    %v291 = vsel %vm203, %v267, %v127
    %v292 = vsel %vm203, %v269, %v128
    %v293 = vsel %vm203, %v271, %v129
    %v294 = vsel %vm203, %v273, %v130
    %v295 = vsel %vm203, %v275, %v131
    %v296 = vsel %vm203, %v277, %v132
    %v297 = vsel %vm203, %v279, %v133
    %v298 = vsel %vm203, %v281, %v134
    %v299 = vsel %vm203, %v283, %v135
    %300 = vrot.lane.b32.xlu0 %v88, 16
    %v301 = vpop.permute.xlu0 %300
    %v302 = vsel %vm203, %v301, %v88
    %303 = vrot.lane.b32.xlu0 %v89, 16
    %v304 = vpop.permute.xlu0 %303
    %v305 = vsel %vm203, %v304, %v89
    %306 = vrot.lane.b32.xlu0 %v90, 16
    %v307 = vpop.permute.xlu0 %306
    %v308 = vsel %vm203, %v307, %v90
    %309 = vrot.lane.b32.xlu0 %v91, 16
    %v310 = vpop.permute.xlu0 %309
    %v311 = vsel %vm203, %v310, %v91
    %312 = vrot.lane.b32.xlu0 %v92, 16
    %v313 = vpop.permute.xlu0 %312
    %v314 = vsel %vm203, %v313, %v92
    %315 = vrot.lane.b32.xlu0 %v93, 16
    %v316 = vpop.permute.xlu0 %315
    %v317 = vsel %vm203, %v316, %v93
    %318 = vrot.lane.b32.xlu0 %v94, 16
    %v319 = vpop.permute.xlu0 %318
    %v320 = vsel %vm203, %v319, %v94
    %321 = vrot.lane.b32.xlu0 %v95, 16
    %v322 = vpop.permute.xlu0 %321
    %v323 = vsel %vm203, %v322, %v95
    %324 = vrot.lane.b32.xlu0 %v96, 16
    %v325 = vpop.permute.xlu0 %324
    %v326 = vsel %vm203, %v325, %v96
    %327 = vrot.lane.b32.xlu0 %v97, 16
    %v328 = vpop.permute.xlu0 %327
    %v329 = vsel %vm203, %v328, %v97
    %330 = vrot.lane.b32.xlu0 %v98, 16
    %v331 = vpop.permute.xlu0 %330
    %v332 = vsel %vm203, %v331, %v98
    %333 = vrot.lane.b32.xlu0 %v99, 16
    %v334 = vpop.permute.xlu0 %333
    %v335 = vsel %vm203, %v334, %v99
    %336 = vrot.lane.b32.xlu0 %v100, 16
    %v337 = vpop.permute.xlu0 %336
    %v338 = vsel %vm203, %v337, %v100
    %339 = vrot.lane.b32.xlu0 %v101, 16
    %v340 = vpop.permute.xlu0 %339
    %v341 = vsel %vm203, %v340, %v101
    %342 = vrot.lane.b32.xlu0 %v102, 16
    %v343 = vpop.permute.xlu0 %342
    %v344 = vsel %vm203, %v343, %v102
    %345 = vrot.lane.b32.xlu0 %v103, 16
    %v346 = vpop.permute.xlu0 %345
    %v347 = vsel %vm203, %v346, %v103
    %348 = vrot.lane.b32.xlu0 %v302, 16
    %v349 = vpop.permute.xlu0 %348
    %350 = vrot.lane.b32.xlu0 %v305, 16
    %v351 = vpop.permute.xlu0 %350
    %352 = vrot.lane.b32.xlu0 %v308, 16
    %v353 = vpop.permute.xlu0 %352
    %354 = vrot.lane.b32.xlu0 %v311, 16
    %v355 = vpop.permute.xlu0 %354
    %356 = vrot.lane.b32.xlu0 %v314, 16
    %v357 = vpop.permute.xlu0 %356
    %358 = vrot.lane.b32.xlu0 %v317, 16
    %v359 = vpop.permute.xlu0 %358
    %360 = vrot.lane.b32.xlu0 %v320, 16
    %v361 = vpop.permute.xlu0 %360
    %362 = vrot.lane.b32.xlu0 %v323, 16
    %v363 = vpop.permute.xlu0 %362
    %364 = vrot.lane.b32.xlu0 %v326, 16
    %v365 = vpop.permute.xlu0 %364
    %366 = vrot.lane.b32.xlu0 %v329, 16
    %v367 = vpop.permute.xlu0 %366
    %368 = vrot.lane.b32.xlu0 %v332, 16
    %v369 = vpop.permute.xlu0 %368
    %370 = vrot.lane.b32.xlu0 %v335, 16
    %v371 = vpop.permute.xlu0 %370
    %372 = vrot.lane.b32.xlu0 %v338, 16
    %v373 = vpop.permute.xlu0 %372
    %374 = vrot.lane.b32.xlu0 %v341, 16
    %v375 = vpop.permute.xlu0 %374
    %376 = vrot.lane.b32.xlu0 %v344, 16
    %v377 = vpop.permute.xlu0 %376
    %378 = vrot.lane.b32.xlu0 %v347, 16
    %v379 = vpop.permute.xlu0 %378
    %v380 = vsel %vm203, %v349, %v88
    %v381 = vsel %vm203, %v351, %v89
    %v382 = vsel %vm203, %v353, %v90
    %v383 = vsel %vm203, %v355, %v91
    %v384 = vsel %vm203, %v357, %v92
    %v385 = vsel %vm203, %v359, %v93
    %v386 = vsel %vm203, %v361, %v94
    %v387 = vsel %vm203, %v363, %v95
    %v388 = vsel %vm203, %v365, %v96
    %v389 = vsel %vm203, %v367, %v97
    %v390 = vsel %vm203, %v369, %v98
    %v391 = vsel %vm203, %v371, %v99
    %v392 = vsel %vm203, %v373, %v100
    %v393 = vsel %vm203, %v375, %v101
    %v394 = vsel %vm203, %v377, %v102
    %v395 = vsel %vm203, %v379, %v103
    %v396 = vadd.s32 %v153, 8
    %vm397 = vcmp.lt.s32.totalorder %v153, 14
    %vm398 = vcmp.lt.s32.totalorder %v396, 14
    %v399 = vlaneseq
    %v400 = vand.u32 %v399, 127
    %vm401 = vcmp.lt.s32.totalorder %v400, 14
    %v402 = vsub.f32 %v120, %v169
    %v403 = vsub.f32 %v121, %v168
    %v404 = vsub.f32 %v122, %v167
    %v405 = vsub.f32 %v123, %v166
    %v406 = vsub.f32 %v124, %v165
    %v407 = vsub.f32 %v125, %v164
    %v408 = vsub.f32 %v126, %v163
    %v409 = vsub.f32 %v127, %v162
    %v410 = vsub.f32 %v128, %v161
    %v411 = vsub.f32 %v129, %v160
    %v412 = vsub.f32 %v130, %v159
    %v413 = vsub.f32 %v131, %v158
    %v414 = vsub.f32 %v132, %v157
    %v415 = vsub.f32 %v133, %v156
    %v416 = vsub.f32 %v134, %v155
    %v417 = vsub.f32 %v135, %v170
    %v418 = vand.u32 2147483647, %v402
    %v419 = vand.u32 2147483647, %v403
    %v420 = vand.u32 2147483647, %v404
    %v421 = vand.u32 2147483647, %v405
    %v422 = vand.u32 2147483647, %v406
    %v423 = vand.u32 2147483647, %v407
    %v424 = vand.u32 2147483647, %v408
    %v425 = vand.u32 2147483647, %v409
    %v426 = vand.u32 2147483647, %v410
    %v427 = vand.u32 2147483647, %v411
    %v428 = vand.u32 2147483647, %v412
    %v429 = vand.u32 2147483647, %v413
    %v430 = vand.u32 2147483647, %v414
    %v431 = vand.u32 2147483647, %v415
    %v432 = vand.u32 2147483647, %v416
    %v433 = vand.u32 2147483647, %v417
    %v434 = vmul.f32 %v88, %v201
    %v435 = vmul.f32 %v89, %v200
    %v436 = vmul.f32 %v90, %v199
    %v437 = vmul.f32 %v91, %v198
    %v438 = vmul.f32 %v92, %v197
    %v439 = vmul.f32 %v93, %v196
    %v440 = vmul.f32 %v94, %v195
    %v441 = vmul.f32 %v95, %v194
    %v442 = vmul.f32 %v96, %v193
    %v443 = vmul.f32 %v97, %v192
    %v444 = vmul.f32 %v98, %v191
    %v445 = vmul.f32 %v99, %v190
    %v446 = vmul.f32 %v100, %v189
    %v447 = vmul.f32 %v101, %v188
    %v448 = vmul.f32 %v102, %v187
    %v449 = vmul.f32 %v103, %v202
    %v450 = vmul.f32 %v418, %v434
    %v451 = vmul.f32 %v419, %v435
    %v452 = vmul.f32 %v420, %v436
    %v453 = vmul.f32 %v421, %v437
    %v454 = vmul.f32 %v422, %v438
    %v455 = vmul.f32 %v423, %v439
    %v456 = vmul.f32 %v424, %v440
    %v457 = vmul.f32 %v425, %v441
    %v458 = vmul.f32 %v426, %v442
    %v459 = vmul.f32 %v427, %v443
    %v460 = vmul.f32 %v428, %v444
    %v461 = vmul.f32 %v429, %v445
    %v462 = vmul.f32 %v430, %v446
    %v463 = vmul.f32 %v431, %v447
    %v464 = vmul.f32 %v432, %v448
    %v465 = vmul.f32 %v433, %v449
    %v466 = vsel %vm397, %v450, 0.0
    %v467 = vsel %vm398, %v451, 0.0
    %v468 = vsel %vm397, %v452, 0.0
    %v469 = vsel %vm398, %v453, 0.0
    %v470 = vsel %vm397, %v454, 0.0
    %v471 = vsel %vm398, %v455, 0.0
    %v472 = vsel %vm397, %v456, 0.0
    %v473 = vsel %vm398, %v457, 0.0
    %v474 = vsel %vm397, %v458, 0.0
    %v475 = vsel %vm398, %v459, 0.0
    %v476 = vsel %vm397, %v460, 0.0
    %v477 = vsel %vm398, %v461, 0.0
    %v478 = vsel %vm397, %v462, 0.0
    %v479 = vsel %vm398, %v463, 0.0
    %v480 = vsel %vm397, %v464, 0.0
    %v481 = vsel %vm398, %v465, 0.0
    %vm482 = vcmask 130048
    %v483 = vsel %vm482, %v466, 0.0
    %v484 = vsel %vm482, %v467, 0.0
    %v485 = vadd.f32 %v483, %v484
    %v486 = vsel %vm482, %v468, 0.0
    %v487 = vadd.f32 %v485, %v486
    %v488 = vsel %vm482, %v469, 0.0
    %v489 = vadd.f32 %v487, %v488
    %v490 = vsel %vm482, %v470, 0.0
    %v491 = vadd.f32 %v489, %v490
    %v492 = vsel %vm482, %v471, 0.0
    %v493 = vadd.f32 %v491, %v492
    %v494 = vsel %vm482, %v472, 0.0
    %v495 = vadd.f32 %v493, %v494
    %v496 = vsel %vm482, %v473, 0.0
    %v497 = vadd.f32 %v495, %v496
    %v498 = vsel %vm482, %v474, 0.0
    %v499 = vadd.f32 %v497, %v498
    %v500 = vsel %vm482, %v475, 0.0
    %v501 = vadd.f32 %v499, %v500
    %v502 = vsel %vm482, %v476, 0.0
    %v503 = vadd.f32 %v501, %v502
    %v504 = vsel %vm482, %v477, 0.0
    %v505 = vadd.f32 %v503, %v504
    %v506 = vsel %vm482, %v478, 0.0
    %v507 = vadd.f32 %v505, %v506
    %v508 = vsel %vm482, %v479, 0.0
    %v509 = vadd.f32 %v507, %v508
    %v510 = vsel %vm482, %v480, 0.0
    %v511 = vadd.f32 %v509, %v510
    %v512 = vsel %vm482, %v481, 0.0
    %v513 = vadd.f32 %v511, %v512
    %514 = vadd.xlane.f32.xlu0 %v513
    %v515 = vpop.xlane.xlu0 %514
    %v516 = vrot.slane %v515, 4
    %v517 = vadd.f32 %v515, %v516
    %v518 = vrot.slane %v517, 2
    %v519 = vadd.f32 %v517, %v518
    %v520 = vrot.slane %v519, 1
    %v521 = vadd.f32 %v519, %v520
    %s522 = vtos %v521
    %539 = vrot.lane.b32.xlu0 %v284, 126
    %v540 = vpop.permute.xlu0 %539
    %541 = vrot.lane.b32.xlu0 %v285, 126
    %v542 = vpop.permute.xlu0 %541
    %543 = vrot.lane.b32.xlu0 %v286, 126
    %v544 = vpop.permute.xlu0 %543
    %545 = vrot.lane.b32.xlu0 %v287, 126
    %v546 = vpop.permute.xlu0 %545
    %547 = vrot.lane.b32.xlu0 %v288, 126
    %v548 = vpop.permute.xlu0 %547
    %549 = vrot.lane.b32.xlu0 %v289, 126
    %v550 = vpop.permute.xlu0 %549
    %551 = vrot.lane.b32.xlu0 %v290, 126
    %v552 = vpop.permute.xlu0 %551
    %553 = vrot.lane.b32.xlu0 %v291, 126
    %v554 = vpop.permute.xlu0 %553
    %555 = vrot.lane.b32.xlu0 %v292, 126
    %v556 = vpop.permute.xlu0 %555
    %557 = vrot.lane.b32.xlu0 %v293, 126
    %v558 = vpop.permute.xlu0 %557
    %559 = vrot.lane.b32.xlu0 %v294, 126
    %v560 = vpop.permute.xlu0 %559
    %561 = vrot.lane.b32.xlu0 %v295, 126
    %v562 = vpop.permute.xlu0 %561
    %563 = vrot.lane.b32.xlu0 %v296, 126
    %v564 = vpop.permute.xlu0 %563
    %565 = vrot.lane.b32.xlu0 %v297, 126
    %v566 = vpop.permute.xlu0 %565
    %567 = vrot.lane.b32.xlu0 %v298, 126
    %v568 = vpop.permute.xlu0 %567
    %569 = vrot.lane.b32.xlu0 %v299, 126
    %v570 = vpop.permute.xlu0 %569
    %v587 = vsub.f32 %v120, %v540
    %v588 = vsub.f32 %v121, %v542
    %v589 = vsub.f32 %v122, %v544
    %v590 = vsub.f32 %v123, %v546
    %v591 = vsub.f32 %v124, %v548
    %v592 = vsub.f32 %v125, %v550
    %v593 = vsub.f32 %v126, %v552
    %v594 = vsub.f32 %v127, %v554
    %v595 = vsub.f32 %v128, %v556
    %v596 = vsub.f32 %v129, %v558
    %v597 = vsub.f32 %v130, %v560
    %v598 = vsub.f32 %v131, %v562
    %v599 = vsub.f32 %v132, %v564
    %v600 = vsub.f32 %v133, %v566
    %v601 = vsub.f32 %v134, %v568
    %v602 = vsub.f32 %v135, %v570
    %v603 = vand.u32 2147483647, %v587
    %v604 = vand.u32 2147483647, %v588
    %v605 = vand.u32 2147483647, %v589
    %v606 = vand.u32 2147483647, %v590
    %v607 = vand.u32 2147483647, %v591
    %v608 = vand.u32 2147483647, %v592
    %v609 = vand.u32 2147483647, %v593
    %v610 = vand.u32 2147483647, %v594
    %v611 = vand.u32 2147483647, %v595
    %v612 = vand.u32 2147483647, %v596
    %v613 = vand.u32 2147483647, %v597
    %v614 = vand.u32 2147483647, %v598
    %v615 = vand.u32 2147483647, %v599
    %v616 = vand.u32 2147483647, %v600
    %v617 = vand.u32 2147483647, %v601
    %v618 = vand.u32 2147483647, %v602
    %635 = vrot.lane.b32.xlu0 %v380, 126
    %v636 = vpop.permute.xlu0 %635
    %637 = vrot.lane.b32.xlu0 %v381, 126
    %v638 = vpop.permute.xlu0 %637
    %639 = vrot.lane.b32.xlu0 %v382, 126
    %v640 = vpop.permute.xlu0 %639
    %641 = vrot.lane.b32.xlu0 %v383, 126
    %v642 = vpop.permute.xlu0 %641
    %643 = vrot.lane.b32.xlu0 %v384, 126
    %v644 = vpop.permute.xlu0 %643
    %645 = vrot.lane.b32.xlu0 %v385, 126
    %v646 = vpop.permute.xlu0 %645
    %647 = vrot.lane.b32.xlu0 %v386, 126
    %v648 = vpop.permute.xlu0 %647
    %649 = vrot.lane.b32.xlu0 %v387, 126
    %v650 = vpop.permute.xlu0 %649
    %651 = vrot.lane.b32.xlu0 %v388, 126
    %v652 = vpop.permute.xlu0 %651
    %653 = vrot.lane.b32.xlu0 %v389, 126
    %v654 = vpop.permute.xlu0 %653
    %655 = vrot.lane.b32.xlu0 %v390, 126
    %v656 = vpop.permute.xlu0 %655
    %657 = vrot.lane.b32.xlu0 %v391, 126
    %v658 = vpop.permute.xlu0 %657
    %659 = vrot.lane.b32.xlu0 %v392, 126
    %v660 = vpop.permute.xlu0 %659
    %661 = vrot.lane.b32.xlu0 %v393, 126
    %v662 = vpop.permute.xlu0 %661
    %663 = vrot.lane.b32.xlu0 %v394, 126
    %v664 = vpop.permute.xlu0 %663
    %665 = vrot.lane.b32.xlu0 %v395, 126
    %v666 = vpop.permute.xlu0 %665
    %v683 = vmul.f32 %v88, %v636
    %v684 = vmul.f32 %v89, %v638
    %v685 = vmul.f32 %v90, %v640
    %v686 = vmul.f32 %v91, %v642
    %v687 = vmul.f32 %v92, %v644
    %v688 = vmul.f32 %v93, %v646
    %v689 = vmul.f32 %v94, %v648
    %v690 = vmul.f32 %v95, %v650
    %v691 = vmul.f32 %v96, %v652
    %v692 = vmul.f32 %v97, %v654
    %v693 = vmul.f32 %v98, %v656
    %v694 = vmul.f32 %v99, %v658
    %v695 = vmul.f32 %v100, %v660
    %v696 = vmul.f32 %v101, %v662
    %v697 = vmul.f32 %v102, %v664
    %v698 = vmul.f32 %v103, %v666
    %v699 = vmul.f32 %v603, %v683
    %v700 = vmul.f32 %v604, %v684
    %v701 = vmul.f32 %v605, %v685
    %v702 = vmul.f32 %v606, %v686
    %v703 = vmul.f32 %v607, %v687
    %v704 = vmul.f32 %v608, %v688
    %v705 = vmul.f32 %v609, %v689
    %v706 = vmul.f32 %v610, %v690
    %v707 = vmul.f32 %v611, %v691
    %v708 = vmul.f32 %v612, %v692
    %v709 = vmul.f32 %v613, %v693
    %v710 = vmul.f32 %v614, %v694
    %v711 = vmul.f32 %v615, %v695
    %v712 = vmul.f32 %v616, %v696
    %v713 = vmul.f32 %v617, %v697
    %v714 = vmul.f32 %v618, %v698
    %v715 = vsel %vm401, %v699, 0.0
    %v716 = vsel %vm401, %v700, 0.0
    %v717 = vsel %vm401, %v701, 0.0
    %v718 = vsel %vm401, %v702, 0.0
    %v719 = vsel %vm401, %v703, 0.0
    %v720 = vsel %vm401, %v704, 0.0
    %v721 = vsel %vm401, %v705, 0.0
    %v722 = vsel %vm401, %v706, 0.0
    %v723 = vsel %vm401, %v707, 0.0
    %v724 = vsel %vm401, %v708, 0.0
    %v725 = vsel %vm401, %v709, 0.0
    %v726 = vsel %vm401, %v710, 0.0
    %v727 = vsel %vm401, %v711, 0.0
    %v728 = vsel %vm401, %v712, 0.0
    %v729 = vsel %vm401, %v713, 0.0
    %v730 = vsel %vm401, %v714, 0.0
    %v731 = vsel %vm482, %v715, 0.0
    %v732 = vsel %vm482, %v716, 0.0
    %v733 = vadd.f32 %v731, %v732
    %v734 = vsel %vm482, %v717, 0.0
    %v735 = vadd.f32 %v733, %v734
    %v736 = vsel %vm482, %v718, 0.0
    %v737 = vadd.f32 %v735, %v736
    %v738 = vsel %vm482, %v719, 0.0
    %v739 = vadd.f32 %v737, %v738
    %v740 = vsel %vm482, %v720, 0.0
    %v741 = vadd.f32 %v739, %v740
    %v742 = vsel %vm482, %v721, 0.0
    %v743 = vadd.f32 %v741, %v742
    %v744 = vsel %vm482, %v722, 0.0
    %v745 = vadd.f32 %v743, %v744
    %v746 = vsel %vm482, %v723, 0.0
    %v747 = vadd.f32 %v745, %v746
    %v748 = vsel %vm482, %v724, 0.0
    %v749 = vadd.f32 %v747, %v748
    %v750 = vsel %vm482, %v725, 0.0
    %v751 = vadd.f32 %v749, %v750
    %v752 = vsel %vm482, %v726, 0.0
    %v753 = vadd.f32 %v751, %v752
    %v754 = vsel %vm482, %v727, 0.0
    %v755 = vadd.f32 %v753, %v754
    %v756 = vsel %vm482, %v728, 0.0
    %v757 = vadd.f32 %v755, %v756
    %v758 = vsel %vm482, %v729, 0.0
    %v759 = vadd.f32 %v757, %v758
    %v760 = vsel %vm482, %v730, 0.0
    %v761 = vadd.f32 %v759, %v760
    %762 = vadd.xlane.f32.xlu0 %v761
    %v763 = vpop.xlane.xlu0 %762
    %v764 = vrot.slane %v763, 4
    %v765 = vadd.f32 %v763, %v764
    %v766 = vrot.slane %v765, 2
    %v767 = vadd.f32 %v765, %v766
    %v768 = vrot.slane %v767, 1
    %v769 = vadd.f32 %v767, %v768
    %s770 = vtos %v769
    %v771 = vsel %vm482, %v88, 0.0
    %v772 = vsel %vm482, %v89, 0.0
    %v773 = vadd.f32 %v771, %v772
    %v774 = vsel %vm482, %v90, 0.0
    %v775 = vadd.f32 %v773, %v774
    %v776 = vsel %vm482, %v91, 0.0
    %v777 = vadd.f32 %v775, %v776
    %v778 = vsel %vm482, %v92, 0.0
    %v779 = vadd.f32 %v777, %v778
    %v780 = vsel %vm482, %v93, 0.0
    %v781 = vadd.f32 %v779, %v780
    %v782 = vsel %vm482, %v94, 0.0
    %v783 = vadd.f32 %v781, %v782
    %v784 = vsel %vm482, %v95, 0.0
    %v785 = vadd.f32 %v783, %v784
    %v786 = vsel %vm482, %v96, 0.0
    %v787 = vadd.f32 %v785, %v786
    %v788 = vsel %vm482, %v97, 0.0
    %v789 = vadd.f32 %v787, %v788
    %v790 = vsel %vm482, %v98, 0.0
    %v791 = vadd.f32 %v789, %v790
    %v792 = vsel %vm482, %v99, 0.0
    %v793 = vadd.f32 %v791, %v792
    %v794 = vsel %vm482, %v100, 0.0
    %v795 = vadd.f32 %v793, %v794
    %v796 = vsel %vm482, %v101, 0.0
    %v797 = vadd.f32 %v795, %v796
    %v798 = vsel %vm482, %v102, 0.0
    %v799 = vadd.f32 %v797, %v798
    %v800 = vsel %vm482, %v103, 0.0
    %v801 = vadd.f32 %v799, %v800
    %802 = vadd.xlane.f32.xlu0 %v801
    %v803 = vpop.xlane.xlu0 %802
    %v804 = vrot.slane %v803, 4
    %v805 = vadd.f32 %v803, %v804
    %v806 = vrot.slane %v805, 2
    %v807 = vadd.f32 %v805, %v806
    %v808 = vrot.slane %v807, 1
    %v809 = vadd.f32 %v807, %v808
    %s810 = vtos %v809
    %s811 = sadd.f32 %s522, %s770
    %vm812 = vcmp.eq.s32.totalorder %v400, 0
    %vm813 = vcmp.eq.s32.totalorder %v400, 1
    %v814 = vstv %s810
    %v815 = vsel %vm813, %v814, 0.0
    %v816 = vstv %s811
    %v817 = vsel %vm812, %v816, %v815
    %818 = vst [vmem:[#allocation10] sm:$0x1] %v817
    // Predicated region
    $region26: #{tpu_custom_call.1} parent=1 // pred_check
      _
    $region27: #{tpu_custom_call.1} parent=1 // pred_check_branch
      %820 = sbr.rel (0) target = $region29
    $region28: #{tpu_custom_call.1} parent=1 // pred_region
      %s822 = ssub.s32 16, 16
      %823 = vsyncadd [#allocation6], %s822
      %s825 = sshll.u32 [#allocation10], 4
      %s826 = int_to_ptr.vmem [resolvable:$true] %s825
      %828 = dma.vmem_to_hbm [thread:$0]  %s826, 16, %s3, [#allocation6]
    $region29: #{tpu_custom_call.1} parent=1 // pred_fallthru
      _
    // Predicated region
    $region30: #{tpu_custom_call.1} parent=1 // pred_check
      _
    $region31: #{tpu_custom_call.1} parent=1 // pred_check_branch
      %830 = sbr.rel (0) target = $region33
    $region32: #{tpu_custom_call.1} parent=1 // pred_region
      %831 = dma.done [#allocation6], 16
    $region33: #{tpu_custom_call.1} parent=1 // pred_fallthru
      _
    %832 = vsyncpa [#allocation5], 1
    %833 = vsyncpa [#allocation8], 1
    %834 = vsyncpa [#allocation6], 1

</llo_original>
